<compile_context>
chip_gen: v5e
topology: v5e:2x2
jax: 0.10.0
libtpu: 0.0.40
codegen_flags: <defaults>
</compile_context>

<pallas_src>
import functools

import jax
import jax.numpy as jnp
from jax.experimental import pallas as pl
from jax.experimental.pallas import tpu as pltpu


def _vat_kernel(x_ref, d_ref, y_ref, w_ref, wt_ref, b_ref, kl_ref,
                *, xi, eps_pos, eps_neg, ip, grad_scale):
    x = x_ref[...]        # (T, D)  flattened clean inputs (one batch tile)
    d = d_ref[...]        # (T, D)  raw random direction (uniform - 0.5)
    y = y_ref[...]        # (T, 1)  binary labels
    w = w_ref[...]        # (D, K)  classifier weight (transposed torch layout)
    wt = wt_ref[...]      # (K, D)  classifier weight (torch layout), for the VJP
    b = b_ref[...]        # (1, K)  classifier bias

    K = w.shape[1]

    def log_softmax(z):
        z = z - jnp.max(z, axis=-1, keepdims=True)
        return z - jnp.log(jnp.sum(jnp.exp(z), axis=-1, keepdims=True))

    def l2_normalize(v):
        # matches torch: v / (||v||_2 + 1e-8); the (T,1) reciprocal is cheap,
        # the large (T,D) op becomes a multiply instead of a divide.
        nrm = jnp.sqrt(jnp.sum(v * v, axis=-1, keepdims=True))
        return v * (1.0 / (nrm + 1e-8))

    # Clean logits, computed once and reused everywhere.
    z_clean = jnp.dot(x, w, preferred_element_type=jnp.float32) + b     # (T, K)
    logp = log_softmax(z_clean)
    p = jnp.exp(logp)                                                   # pred (no grad)

    # d = _l2_normalize(rand(x.shape) - 0.5)
    d = l2_normalize(d)

    # Power iteration(s).  ip is a small static int (default 1), so a Python
    # loop (full unroll) is fine; switch to lax.fori_loop(unroll=True) if ip
    # ever grows large.
    for _ in range(ip):
        dw = jnp.dot(d, w, preferred_element_type=jnp.float32)          # (T, K)
        z_hat = z_clean + xi * dw          # == logits(x + xi*d), no (T,D) temp
        q = jnp.exp(log_softmax(z_hat))
        # grad of the mean-reduced KL w.r.t. d; the xi/(N*K) constants are kept
        # (folded into the tiny (T,K) array) because the +1e-8 in
        # _l2_normalize makes the gradient *magnitude* matter.
        grad_z = (q - p) * grad_scale                                    # (T, K)
        # (T,K)@(K,D) with K=2 wastes the MXU -> K broadcast-FMAs on the VPU.
        grad_d = grad_z[:, 0:1] * wt[0:1, :]
        for k in range(1, K):
            grad_d = grad_d + grad_z[:, k:k + 1] * wt[k:k + 1, :]        # (T, D)
        d = l2_normalize(grad_d)

    # r_adv = d * (eps_pos*y + eps_neg*(1-y)); but (d*scale)@W == scale*(d@W),
    # so the adversarial logits are formed directly in logit space.
    scale = eps_pos * y + eps_neg * (1.0 - y)                            # (T, 1)
    dw = jnp.dot(d, w, preferred_element_type=jnp.float32)               # (T, K)
    z_adv = z_clean + scale * dw
    logq = log_softmax(z_adv)

    # Per-row KL partial sums; the wrapper sums them and divides by N*K
    # (reduction='mean').  Zero-padded rows contribute exactly 0.
    kl_ref[...] = jnp.sum(p * (logp - logq), axis=-1, keepdims=True)     # (T, 1)


def _choose_tile_n(n, d):
    """Pick a batch tile that keeps the pipelined VMEM footprint well inside
    the 32 MiB scoped limit requested below (safe on v5e/v6e/v7x; v7x has only
    64 MiB physical VMEM)."""
    budget = 12 * 1024 * 1024
    # 2 streams (x, d) x 2 pipeline buffers + ~3 in-kernel (T, D) temporaries.
    per_row = (2 * 2 + 3) * d * 4
    t = max(8, min(1024, budget // max(per_row, 1)))
    t = max(8, (t // 8) * 8)                   # sublane-aligned
    t = min(t, ((n + 7) // 8) * 8)             # don't over-pad tiny batches
    return t


def vat_loss2(x, y, w, b, *, xi=1e-6, eps_pos=100.0, eps_neg=1.0, ip=1,
              noise_key=None, tile_n=None):
    """x: (N, C, L) f32, y: (N,) binary f32, model = Linear(C*L -> K)
    (w: (K, D), b: (K,))."""
    N, C, L = x.shape
    D = C * L
    K = w.shape[0]

    x_flat = x.reshape(N, D).astype(jnp.float32)
    # torch.rand(x.shape).sub(0.5)
    d0 = jax.random.uniform(noise_key, (N, D), dtype=jnp.float32) - 0.5
    y2 = y.reshape(N, 1).astype(jnp.float32)
    w_dk = jnp.transpose(w).astype(jnp.float32)        # (D, K)
    wt_kd = w.astype(jnp.float32)                      # (K, D)
    b2 = b.reshape(1, K).astype(jnp.float32)

    if tile_n is None:
        tile_n = _choose_tile_n(N, D)
    tile_n = max(8, (int(tile_n) // 8) * 8)
    n_pad = pl.cdiv(N, tile_n) * tile_n
    if n_pad != N:
        pad = n_pad - N
        # Zero rows contribute exactly 0 to the KL sum (d=0 -> r_adv=0).
        x_flat = jnp.pad(x_flat, ((0, pad), (0, 0)))
        d0 = jnp.pad(d0, ((0, pad), (0, 0)))
        y2 = jnp.pad(y2, ((0, pad), (0, 0)))

    kernel = functools.partial(
        _vat_kernel, xi=float(xi), eps_pos=float(eps_pos),
        eps_neg=float(eps_neg), ip=int(ip),
        grad_scale=float(xi) / float(N * K))

    grid_spec = pltpu.PrefetchScalarGridSpec(
        num_scalar_prefetch=0,
        grid=(n_pad // tile_n,),
        in_specs=[
            pl.BlockSpec((tile_n, D), lambda i: (i, 0)),   # x tile (pipelined)
            pl.BlockSpec((tile_n, D), lambda i: (i, 0)),   # d tile (pipelined)
            pl.BlockSpec((tile_n, 1), lambda i: (i, 0)),   # y tile
            pl.BlockSpec((D, K), lambda i: (0, 0)),        # w  (broadcast)
            pl.BlockSpec((K, D), lambda i: (0, 0)),        # w^T (broadcast)
            pl.BlockSpec((1, K), lambda i: (0, 0)),        # b  (broadcast)
        ],
        out_specs=pl.BlockSpec((tile_n, 1), lambda i: (i, 0)),
    )

    kl_rows = pl.pallas_call(
        kernel,
        out_shape=jax.ShapeDtypeStruct((n_pad, 1), jnp.float32),
        grid_spec=grid_spec,
        compiler_params=pltpu.CompilerParams(
            dimension_semantics=("parallel",),          # independent batch tiles
            vmem_limit_bytes=32 * 1024 * 1024),
    )(x_flat, d0, y2, w_dk, wt_kd, b2)

    # reduction='mean' over the true N*K elements (padding rows are exact 0).
    return jnp.sum(kl_rows) / (N * K)


def _vat_loss2_ref(x, y, w, b, *, xi, eps_pos, eps_neg, ip, noise_key):
    """Pure-JAX reference (jax.grad for the power-iteration backward).  Uses
    the mathematically identical z_clean + xi*(d@W) formulation of the
    perturbed logits (exact in real arithmetic, avoids the f32 cancellation
    of x + 1e-6*d)."""
    N, C, L = x.shape
    D, K = C * L, w.shape[0]
    x_flat = x.reshape(N, D).astype(jnp.float32)
    d = jax.random.uniform(noise_key, (N, D), dtype=jnp.float32) - 0.5
    y2 = y.reshape(N, 1).astype(jnp.float32)

    z_clean = x_flat @ w.T + b[None, :]
    logp = jax.nn.log_softmax(z_clean, axis=-1)
    p = jnp.exp(logp)

    def l2n(v):
        return v / (jnp.linalg.norm(v, axis=-1, keepdims=True) + 1e-8)

    d = l2n(d)

    def kl_of_d(dd):
        logq = jax.nn.log_softmax(z_clean + xi * (dd @ w.T), axis=-1)
        return jnp.mean(p * (logp - logq))

    for _ in range(ip):
        d = l2n(jax.grad(kl_of_d)(d))

    scale = eps_pos * y2 + eps_neg * (1.0 - y2)
    logq = jax.nn.log_softmax(z_clean + scale * (d @ w.T), axis=-1)
    return jnp.mean(p * (logp - logq))


if __name__ == "__main__":
    key = jax.random.PRNGKey(0)
    kx, ky, kw, kb, kd = jax.random.split(key, 5)

    N, C, L, K = 8, 4, 16, 2        # small shapes; K=2 -> binary classifier
    D = C * L

    x = jax.random.normal(kx, (N, C, L), dtype=jnp.float32)
    y = jax.random.bernoulli(ky, 0.5, (N,)).astype(jnp.float32)
    # deterministic synthetic "model" parameters: Linear(D -> K)
    w = 0.1 * jax.random.normal(kw, (K, D), dtype=jnp.float32)
    b = 0.1 * jax.random.normal(kb, (K,), dtype=jnp.float32)

    # 1) module defaults (xi=1e-6, eps_pos=100, eps_neg=1, ip=1)
    lds_default = vat_loss2(x, y, w, b, noise_key=kd)
    jax.block_until_ready(lds_default)
    ref_default = _vat_loss2_ref(x, y, w, b, xi=1e-6, eps_pos=100.0,
                                 eps_neg=1.0, ip=1, noise_key=kd)
    assert jnp.isfinite(lds_default)
    assert abs(float(lds_default) - float(ref_default)) < (
        1e-5 + 1e-3 * abs(float(ref_default))), (
        float(lds_default), float(ref_default))

    # 2) better-conditioned xi to meaningfully exercise the power iteration
    lds = vat_loss2(x, y, w, b, xi=5e-2, eps_pos=100.0, eps_neg=1.0, ip=1,
                    noise_key=kd)
    jax.block_until_ready(lds)
    ref = _vat_loss2_ref(x, y, w, b, xi=5e-2, eps_pos=100.0, eps_neg=1.0, ip=1,
                         noise_key=kd)
    assert jnp.isfinite(lds)
    assert abs(float(lds) - float(ref)) < 1e-4 + 1e-3 * abs(float(ref)), (
        float(lds), float(ref))

    # 3) exercise the multi-tile grid + zero-padding path (N not a multiple of
    #    the tile), forcing a small tile so the grid has several steps.
    N2 = 20
    kx2, ky2, kd2 = jax.random.split(jax.random.PRNGKey(1), 3)
    x2 = jax.random.normal(kx2, (N2, C, L), dtype=jnp.float32)
    y2 = jax.random.bernoulli(ky2, 0.5, (N2,)).astype(jnp.float32)
    lds2 = vat_loss2(x2, y2, w, b, xi=5e-2, eps_pos=100.0, eps_neg=1.0, ip=1,
                     noise_key=kd2, tile_n=8)
    jax.block_until_ready(lds2)
    ref2 = _vat_loss2_ref(x2, y2, w, b, xi=5e-2, eps_pos=100.0, eps_neg=1.0,
                          ip=1, noise_key=kd2)
    assert jnp.isfinite(lds2)
    assert abs(float(lds2) - float(ref2)) < 1e-4 + 1e-3 * abs(float(ref2)), (
        float(lds2), float(ref2))

    print("KERNEL_OK")
</pallas_src>

<mosaic_0001>
module attributes {stable_mosaic.version = 11 : i64} {
  func.func @_vat_kernel(%arg0: i32, %arg1: memref<8x64xf32, #tpu.memory_space<vmem>>, %arg2: memref<8x64xf32, #tpu.memory_space<vmem>>, %arg3: memref<8x1xf32, #tpu.memory_space<vmem>>, %arg4: memref<64x2xf32, #tpu.memory_space<vmem>>, %arg5: memref<2x64xf32, #tpu.memory_space<vmem>>, %arg6: memref<1x2xf32, #tpu.memory_space<vmem>>, %arg7: memref<8x1xf32, #tpu.memory_space<vmem>>) attributes {dimension_semantics = [#tpu.dimension_semantics<parallel>], iteration_bounds = array<i64: 1>, scalar_prefetch = 0 : i64, scratch_operands = 0 : i64, tpu.core_type = #tpu.core_type<tc>, window_params = [{transform_indices = @transform_0, window_bounds = array<i64: 8, 64>}, {transform_indices = @transform_1, window_bounds = array<i64: 8, 64>}, {transform_indices = @transform_2, window_bounds = array<i64: 8, 1>}, {pipeline_mode = #tpu.pipeline_mode<synchronous>, transform_indices = @transform_3, window_bounds = array<i64: 64, 2>}, {pipeline_mode = #tpu.pipeline_mode<synchronous>, transform_indices = @transform_4, window_bounds = array<i64: 2, 64>}, {pipeline_mode = #tpu.pipeline_mode<synchronous>, transform_indices = @transform_5, window_bounds = array<i64: 1, 2>}, {transform_indices = @transform_6, window_bounds = array<i64: 8, 1>}]} {
    %c0 = arith.constant 0 : index
    %c0_0 = arith.constant 0 : index
    %0 = vector.load %arg1[%c0, %c0_0] : memref<8x64xf32, #tpu.memory_space<vmem>>, vector<8x64xf32>
    %c0_1 = arith.constant 0 : index
    %c0_2 = arith.constant 0 : index
    %1 = vector.load %arg2[%c0_1, %c0_2] : memref<8x64xf32, #tpu.memory_space<vmem>>, vector<8x64xf32>
    %c0_3 = arith.constant 0 : index
    %c0_4 = arith.constant 0 : index
    %2 = vector.load %arg3[%c0_3, %c0_4] : memref<8x1xf32, #tpu.memory_space<vmem>>, vector<8x1xf32>
    %c0_5 = arith.constant 0 : index
    %c0_6 = arith.constant 0 : index
    %3 = vector.load %arg4[%c0_5, %c0_6] : memref<64x2xf32, #tpu.memory_space<vmem>>, vector<64x2xf32>
    %c0_7 = arith.constant 0 : index
    %c0_8 = arith.constant 0 : index
    %4 = vector.load %arg5[%c0_7, %c0_8] : memref<2x64xf32, #tpu.memory_space<vmem>>, vector<2x64xf32>
    %c0_9 = arith.constant 0 : index
    %c0_10 = arith.constant 0 : index
    %5 = vector.load %arg6[%c0_9, %c0_10] : memref<1x2xf32, #tpu.memory_space<vmem>>, vector<1x2xf32>
    %cst = arith.constant dense<0.000000e+00> : vector<8x2xf32>
    %6 = tpu.matmul %0, %3, %cst {dimension_numbers = #tpu.dot_dimension_numbers<[1], [0], [0], [1], [0, 0, 1, 1], [], []>} : vector<8x64xf32>, vector<64x2xf32>, vector<8x2xf32> -> vector<8x2xf32>
    %7 = vector.broadcast %5 : vector<1x2xf32> to vector<8x2xf32>
    %8 = arith.addf %6, %7 : vector<8x2xf32>
    %cst_11 = arith.constant dense<0xFF800000> : vector<8xf32>
    %9 = vector.multi_reduction <maximumf>, %8, %cst_11 [1] : vector<8x2xf32> to vector<8xf32>
    %10 = vector.shape_cast %9 : vector<8xf32> to vector<8x1xf32>
    %11 = vector.broadcast %10 : vector<8x1xf32> to vector<8x2xf32>
    %12 = arith.subf %8, %11 : vector<8x2xf32>
    %13 = math.exp %12 : vector<8x2xf32>
    %cst_12 = arith.constant dense<0.000000e+00> : vector<8xf32>
    %14 = vector.multi_reduction <add>, %13, %cst_12 [1] : vector<8x2xf32> to vector<8xf32>
    %15 = vector.shape_cast %14 : vector<8xf32> to vector<8x1xf32>
    %16 = math.log %15 : vector<8x1xf32>
    %17 = vector.broadcast %16 : vector<8x1xf32> to vector<8x2xf32>
    %18 = arith.subf %12, %17 : vector<8x2xf32>
    %19 = math.exp %18 : vector<8x2xf32>
    %20 = arith.mulf %1, %1 : vector<8x64xf32>
    %cst_13 = arith.constant dense<0.000000e+00> : vector<8xf32>
    %21 = vector.multi_reduction <add>, %20, %cst_13 [1] : vector<8x64xf32> to vector<8xf32>
    %22 = vector.shape_cast %21 : vector<8xf32> to vector<8x1xf32>
    %23 = math.sqrt %22 : vector<8x1xf32>
    %cst_14 = arith.constant 9.99999993E-9 : f32
    %24 = vector.broadcast %cst_14 : f32 to vector<8x1xf32>
    %25 = arith.addf %23, %24 : vector<8x1xf32>
    %cst_15 = arith.constant 1.000000e+00 : f32
    %26 = vector.broadcast %cst_15 : f32 to vector<8x1xf32>
    %27 = arith.divf %26, %25 : vector<8x1xf32>
    %28 = vector.broadcast %27 : vector<8x1xf32> to vector<8x64xf32>
    %29 = arith.mulf %1, %28 : vector<8x64xf32>
    %cst_16 = arith.constant dense<0.000000e+00> : vector<8x2xf32>
    %30 = tpu.matmul %29, %3, %cst_16 {dimension_numbers = #tpu.dot_dimension_numbers<[1], [0], [0], [1], [0, 0, 1, 1], [], []>} : vector<8x64xf32>, vector<64x2xf32>, vector<8x2xf32> -> vector<8x2xf32>
    %cst_17 = arith.constant 9.99999997E-7 : f32
    %31 = vector.broadcast %cst_17 : f32 to vector<8x2xf32>
    %32 = arith.mulf %31, %30 : vector<8x2xf32>
    %33 = arith.addf %8, %32 : vector<8x2xf32>
    %cst_18 = arith.constant dense<0xFF800000> : vector<8xf32>
    %34 = vector.multi_reduction <maximumf>, %33, %cst_18 [1] : vector<8x2xf32> to vector<8xf32>
    %35 = vector.shape_cast %34 : vector<8xf32> to vector<8x1xf32>
    %36 = vector.broadcast %35 : vector<8x1xf32> to vector<8x2xf32>
    %37 = arith.subf %33, %36 : vector<8x2xf32>
    %38 = math.exp %37 : vector<8x2xf32>
    %cst_19 = arith.constant dense<0.000000e+00> : vector<8xf32>
    %39 = vector.multi_reduction <add>, %38, %cst_19 [1] : vector<8x2xf32> to vector<8xf32>
    %40 = vector.shape_cast %39 : vector<8xf32> to vector<8x1xf32>
    %41 = math.log %40 : vector<8x1xf32>
    %42 = vector.broadcast %41 : vector<8x1xf32> to vector<8x2xf32>
    %43 = arith.subf %37, %42 : vector<8x2xf32>
    %44 = math.exp %43 : vector<8x2xf32>
    %45 = arith.subf %44, %19 : vector<8x2xf32>
    %cst_20 = arith.constant 6.24999998E-8 : f32
    %46 = vector.broadcast %cst_20 : f32 to vector<8x2xf32>
    %47 = arith.mulf %45, %46 : vector<8x2xf32>
    %48 = vector.extract_strided_slice %47 {offsets = [0, 0], sizes = [8, 1], strides = [1, 1]} : vector<8x2xf32> to vector<8x1xf32>
    %49 = vector.extract_strided_slice %4 {offsets = [0, 0], sizes = [1, 64], strides = [1, 1]} : vector<2x64xf32> to vector<1x64xf32>
    %50 = vector.broadcast %48 : vector<8x1xf32> to vector<8x64xf32>
    %51 = vector.broadcast %49 : vector<1x64xf32> to vector<8x64xf32>
    %52 = arith.mulf %50, %51 : vector<8x64xf32>
    %53 = vector.extract_strided_slice %47 {offsets = [0, 1], sizes = [8, 1], strides = [1, 1]} : vector<8x2xf32> to vector<8x1xf32>
    %54 = vector.extract_strided_slice %4 {offsets = [1, 0], sizes = [1, 64], strides = [1, 1]} : vector<2x64xf32> to vector<1x64xf32>
    %55 = vector.broadcast %53 : vector<8x1xf32> to vector<8x64xf32>
    %56 = vector.broadcast %54 : vector<1x64xf32> to vector<8x64xf32>
    %57 = arith.mulf %55, %56 : vector<8x64xf32>
    %58 = arith.addf %52, %57 : vector<8x64xf32>
    %59 = arith.mulf %58, %58 : vector<8x64xf32>
    %cst_21 = arith.constant dense<0.000000e+00> : vector<8xf32>
    %60 = vector.multi_reduction <add>, %59, %cst_21 [1] : vector<8x64xf32> to vector<8xf32>
    %61 = vector.shape_cast %60 : vector<8xf32> to vector<8x1xf32>
    %62 = math.sqrt %61 : vector<8x1xf32>
    %cst_22 = arith.constant 9.99999993E-9 : f32
    %63 = vector.broadcast %cst_22 : f32 to vector<8x1xf32>
    %64 = arith.addf %62, %63 : vector<8x1xf32>
    %cst_23 = arith.constant 1.000000e+00 : f32
    %65 = vector.broadcast %cst_23 : f32 to vector<8x1xf32>
    %66 = arith.divf %65, %64 : vector<8x1xf32>
    %67 = vector.broadcast %66 : vector<8x1xf32> to vector<8x64xf32>
    %68 = arith.mulf %58, %67 : vector<8x64xf32>
    %cst_24 = arith.constant 1.000000e+02 : f32
    %69 = vector.broadcast %cst_24 : f32 to vector<8x1xf32>
    %70 = arith.mulf %69, %2 : vector<8x1xf32>
    %cst_25 = arith.constant 1.000000e+00 : f32
    %71 = vector.broadcast %cst_25 : f32 to vector<8x1xf32>
    %72 = arith.subf %71, %2 : vector<8x1xf32>
    %cst_26 = arith.constant 1.000000e+00 : f32
    %73 = vector.broadcast %cst_26 : f32 to vector<8x1xf32>
    %74 = arith.mulf %73, %72 : vector<8x1xf32>
    %75 = arith.addf %70, %74 : vector<8x1xf32>
    %cst_27 = arith.constant dense<0.000000e+00> : vector<8x2xf32>
    %76 = tpu.matmul %68, %3, %cst_27 {dimension_numbers = #tpu.dot_dimension_numbers<[1], [0], [0], [1], [0, 0, 1, 1], [], []>} : vector<8x64xf32>, vector<64x2xf32>, vector<8x2xf32> -> vector<8x2xf32>
    %77 = vector.broadcast %75 : vector<8x1xf32> to vector<8x2xf32>
    %78 = arith.mulf %77, %76 : vector<8x2xf32>
    %79 = arith.addf %8, %78 : vector<8x2xf32>
    %cst_28 = arith.constant dense<0xFF800000> : vector<8xf32>
    %80 = vector.multi_reduction <maximumf>, %79, %cst_28 [1] : vector<8x2xf32> to vector<8xf32>
    %81 = vector.shape_cast %80 : vector<8xf32> to vector<8x1xf32>
    %82 = vector.broadcast %81 : vector<8x1xf32> to vector<8x2xf32>
    %83 = arith.subf %79, %82 : vector<8x2xf32>
    %84 = math.exp %83 : vector<8x2xf32>
    %cst_29 = arith.constant dense<0.000000e+00> : vector<8xf32>
    %85 = vector.multi_reduction <add>, %84, %cst_29 [1] : vector<8x2xf32> to vector<8xf32>
    %86 = vector.shape_cast %85 : vector<8xf32> to vector<8x1xf32>
    %87 = math.log %86 : vector<8x1xf32>
    %88 = vector.broadcast %87 : vector<8x1xf32> to vector<8x2xf32>
    %89 = arith.subf %83, %88 : vector<8x2xf32>
    %90 = arith.subf %18, %89 : vector<8x2xf32>
    %91 = arith.mulf %19, %90 : vector<8x2xf32>
    %cst_30 = arith.constant dense<0.000000e+00> : vector<8xf32>
    %92 = vector.multi_reduction <add>, %91, %cst_30 [1] : vector<8x2xf32> to vector<8xf32>
    %93 = vector.shape_cast %92 : vector<8xf32> to vector<8x1xf32>
    %c0_31 = arith.constant 0 : index
    %c0_32 = arith.constant 0 : index
    %94 = vector.load %arg7[%c0_31, %c0_32] : memref<8x1xf32, #tpu.memory_space<vmem>>, vector<8x1xf32>
    tpu.vector_store %arg7[%c0_31, %c0_32], %93 {strides = array<i32>} : memref<8x1xf32, #tpu.memory_space<vmem>>, vector<8x1xf32>,
    return
  }
  func.func @transform_0(%arg0: i32) -> (i32, i32) {
    %c0_i32 = arith.constant 0 : i32
    %c0_i32_0 = arith.constant 0 : i32
    return %arg0, %c0_i32 : i32, i32
  }
  func.func @transform_1(%arg0: i32) -> (i32, i32) {
    %c0_i32 = arith.constant 0 : i32
    %c0_i32_0 = arith.constant 0 : i32
    return %arg0, %c0_i32 : i32, i32
  }
  func.func @transform_2(%arg0: i32) -> (i32, i32) {
    %c0_i32 = arith.constant 0 : i32
    %c0_i32_0 = arith.constant 0 : i32
    return %arg0, %c0_i32 : i32, i32
  }
  func.func @transform_3(%arg0: i32) -> (i32, i32) {
    %c0_i32 = arith.constant 0 : i32
    %c0_i32_0 = arith.constant 0 : i32
    %c0_i32_1 = arith.constant 0 : i32
    return %c0_i32, %c0_i32_0 : i32, i32
  }
  func.func @transform_4(%arg0: i32) -> (i32, i32) {
    %c0_i32 = arith.constant 0 : i32
    %c0_i32_0 = arith.constant 0 : i32
    %c0_i32_1 = arith.constant 0 : i32
    return %c0_i32, %c0_i32_0 : i32, i32
  }
  func.func @transform_5(%arg0: i32) -> (i32, i32) {
    %c0_i32 = arith.constant 0 : i32
    %c0_i32_0 = arith.constant 0 : i32
    %c0_i32_1 = arith.constant 0 : i32
    return %c0_i32, %c0_i32_0 : i32, i32
  }
  func.func @transform_6(%arg0: i32) -> (i32, i32) {
    %c0_i32 = arith.constant 0 : i32
    %c0_i32_0 = arith.constant 0 : i32
    return %arg0, %c0_i32 : i32, i32
  }
}

</mosaic_0001>

<llo_original>
// kernel: tpu_custom_call.1
$region0: #{tpu_custom_call.1}
  #allocation0 [shape = 'u32[]', space=smem, size = 0x4, offset = 0x4, fixed_abs, tag = 'smem constant byte address 0x4 - core index']
  #allocation1 [shape = 'u32[72,128]{1,0:T(1,128)}', space=vmem, size = 0x9000, scoped, tag = 'internal scratch']
  %s0 = inlined_call_operand.vmem [shape: f32[8,64], index: 0, kind: input, shape index: {}]
  %s1 = inlined_call_operand.vmem [shape: f32[8,64], index: 1, kind: input, shape index: {}]
  %s2 = inlined_call_operand.vmem [shape: f32[8,1], index: 2, kind: input, shape index: {}]
  %s3 = inlined_call_operand.vmem [shape: f32[64,2], index: 3, kind: input, shape index: {}]
  %s4 = inlined_call_operand.vmem [shape: f32[2,64], index: 4, kind: input, shape index: {}]
  %s5 = inlined_call_operand.vmem [shape: f32[1,2], index: 5, kind: input, shape index: {}]
  %s6 = inlined_call_operand.vmem [shape: f32[8,1], index: 6, kind: output, shape index: {}]
  %s7 = sld [smem:[#allocation0]]
  $region34: #{tpu_custom_call.1} parent=0
    _
  %s9 = ssub.s32 1, %s7
  %s10 = scalar_select 0, %s9, %s7
  // Predicated region
  $region2: #{tpu_custom_call.1} parent=0 // pred_check
    _
  $region3: #{tpu_custom_call.1} parent=0 // pred_check_branch
    %12 = sbr.rel (0) target = $region5
  $region4: #{tpu_custom_call.1} parent=0 // pred_region
    _
  $region5: #{tpu_custom_call.1} parent=0 // pred_fallthru
    _
  // Predicated region
  $region6: #{tpu_custom_call.1} parent=0 // pred_check
    _
  $region7: #{tpu_custom_call.1} parent=0 // pred_check_branch
    %14 = sbr.rel (0) target = $region9
  $region8: #{tpu_custom_call.1} parent=0 // pred_region
    _
  $region9: #{tpu_custom_call.1} parent=0 // pred_fallthru
    _
  // Predicated region
  $region10: #{tpu_custom_call.1} parent=0 // pred_check
    _
  $region11: #{tpu_custom_call.1} parent=0 // pred_check_branch
    %16 = sbr.rel (0) target = $region13
  $region12: #{tpu_custom_call.1} parent=0 // pred_region
    _
  $region13: #{tpu_custom_call.1} parent=0 // pred_fallthru
    _
  // Predicated region
  $region14: #{tpu_custom_call.1} parent=0 // pred_check
    _
  $region15: #{tpu_custom_call.1} parent=0 // pred_check_branch
    %18 = sbr.rel (0) target = $region17
  $region16: #{tpu_custom_call.1} parent=0 // pred_region
    _
  $region17: #{tpu_custom_call.1} parent=0 // pred_fallthru
    _
  // Predicated region
  $region18: #{tpu_custom_call.1} parent=0 // pred_check
    _
  $region19: #{tpu_custom_call.1} parent=0 // pred_check_branch
    %20 = sbr.rel (0) target = $region21
  $region20: #{tpu_custom_call.1} parent=0 // pred_region
    _
  $region21: #{tpu_custom_call.1} parent=0 // pred_fallthru
    _
  // Predicated region
  $region22: #{tpu_custom_call.1} parent=0 // pred_check
    _
  $region23: #{tpu_custom_call.1} parent=0 // pred_check_branch
    %22 = sbr.rel (0) target = $region25
  $region24: #{tpu_custom_call.1} parent=0 // pred_region
    _
  $region25: #{tpu_custom_call.1} parent=0 // pred_fallthru
    _
  %v23 = vld [vmem:[%s0] sm:$0xff]
  %v24 = vld [vmem:[%s1] sm:$0xff]
  %v25 = vld [vmem:[%s2] sm:$0xff]
  %v26 = vld [vmem:[%s3] sm:$0xff]
  %v27 = vld [vmem:[%s3 + $0x8] sm:$0xff]
  %v28 = vld [vmem:[%s3 + $0x10] sm:$0xff]
  %v29 = vld [vmem:[%s3 + $0x18] sm:$0xff]
  %v30 = vld [vmem:[%s3 + $0x20] sm:$0xff]
  %v31 = vld [vmem:[%s3 + $0x28] sm:$0xff]
  %v32 = vld [vmem:[%s3 + $0x30] sm:$0xff]
  %v33 = vld [vmem:[%s3 + $0x38] sm:$0xff]
  %v34 = vld [vmem:[%s4] sm:$0x3]
  %v35 = vld [vmem:[%s5] sm:$0x1]
  %v37 = vperm.slane %v35, 0
  %vm39 = vcmask 523264
  %v41 = vsel %vm39, %v23, 0
  %43 = vmatpush.msra.mxu0 0.0
  %44 = vmatpush.msra.mxu0 0.0
  %45 = vmatpush.msra.mxu0 0.0
  %46 = vmatpush.msra.mxu0 0.0
  %47 = vmatpush.msra.mxu0 0.0
  %48 = vmatpush.msra.mxu0 0.0
  %49 = vmatpush.msra.mxu0 0.0
  %50 = vmatpush.msra.mxu0 0.0
  %51 = vmatpush.msra.mxu0 %v33
  %52 = vmatpush.msra.mxu0 %v32
  %53 = vmatpush.msra.mxu0 %v31
  %54 = vmatpush.msra.mxu0 %v30
  %55 = vmatpush.msra.mxu0 %v29
  %56 = vmatpush.msra.mxu0 %v28
  %57 = vmatpush.msra.mxu0 %v27
  %58 = vmatpush.msra.mxu0 %v26
  %59 = vmatmul.f32.gmra.mxu0 %v41
  %v60 = vpop.f32.mrf.mxu0
  %v61 = vadd.f32 %v37, %v60
  %62 = vdwg.mxu0
  %vm63 = vcmask 15360
  %v64 = vsel %vm63, %v61, -inf
  %65 = vmax.xlane.f32.xlu0 %v64
  %v66 = vpop.xlane.xlu0 %65
  %v67 = vsub.f32 %v61, %v66
  %v68 = vmul.f32 %v67, 1.442695
  %v69 = vpow.pop %v68
  %v70 = vsel %vm63, %v69, 0.0
  %71 = vadd.xlane.f32.xlu0 %v70
  %v72 = vpop.xlane.xlu0 %71
  %v73 = vlog2.pop %v72
  %v74 = vmul.f32 %v73, 0.6931472
  %v75 = vsub.f32 %v67, %v74
  %v76 = vmul.f32 %v75, 1.442695
  %v77 = vpow.pop %v76
  %v78 = vmul.f32 %v24, %v24
  %v79 = vsel %vm39, %v78, 0.0
  %80 = vadd.xlane.f32.xlu0 %v79
  %v81 = vpop.xlane.xlu0 %80
  %v82 = vrsqrt.pop %v81
  %v83 = vmul.f32 %v82, %v81
  %v84 = vmul.f32 %v83, %v82
  %v85 = vmul.f32 0.5, %v84
  %v86 = vsub.f32 1.5, %v85
  %v87 = vmul.f32 %v82, %v86
  %v88 = vmul.f32 %v81, %v87
  %vm89 = vcmp.eq.f32.partialorder %v81, inf
  %v90 = vsel %vm89, %v81, %v88
  %vm91 = vcmp.eq.f32.partialorder %v81, 0.0
  %v92 = vand.u32 %v81, 2147483648
  %v93 = vsel %vm91, %v92, %v90
  %v94 = vadd.f32 %v93, 1e-08
  %v95 = vrcp.pop %v94
  %v96 = vmul.f32 %v94, %v95
  %v97 = vsub.f32 1.0, %v96
  %v98 = vmul.f32 %v95, %v97
  %v99 = vadd.f32 %v95, %v98
  %vm100 = vweird.f32 %v94
  %vm101 = vweird.f32 %v95
  %vm102 = vmor %vm100, %vm101
  %v103 = vsel %vm102, %v95, %v99
  %v104 = vand.u32 2147483647, %v94
  %vm105 = vcmp.eq.f32.partialorder %v104, 8.507059e+37
  %v106 = vand.u32 %v94, 2147483648
  %v107 = vor.u32 1.1754944e-38, %v106
  %v108 = vsel %vm105, %v107, %v103
  %v109 = vmul.f32 1.0, %v108
  %v110 = vmul.f32 %v24, %v109
  %v112 = vsel %vm39, %v110, 0
  %114 = vmatpush.msra.mxu0 0.0
  %115 = vmatpush.msra.mxu0 0.0
  %116 = vmatpush.msra.mxu0 0.0
  %117 = vmatpush.msra.mxu0 0.0
  %118 = vmatpush.msra.mxu0 0.0
  %119 = vmatpush.msra.mxu0 0.0
  %120 = vmatpush.msra.mxu0 0.0
  %121 = vmatpush.msra.mxu0 0.0
  %122 = vmatpush.msra.mxu0 %v33
  %123 = vmatpush.msra.mxu0 %v32
  %124 = vmatpush.msra.mxu0 %v31
  %125 = vmatpush.msra.mxu0 %v30
  %126 = vmatpush.msra.mxu0 %v29
  %127 = vmatpush.msra.mxu0 %v28
  %128 = vmatpush.msra.mxu0 %v27
  %129 = vmatpush.msra.mxu0 %v26
  %130 = vmatmul.f32.gmra.mxu0 %v112
  %v131 = vpop.f32.mrf.mxu0
  %v132 = vadd.f32 0.0, %v131
  %133 = vdwg.mxu0
  %v134 = vmul.f32 %v132, 1e-06
  %v135 = vadd.f32 %v61, %v134
  %v136 = vsel %vm63, %v135, -inf
  %137 = vmax.xlane.f32.xlu0 %v136
  %v138 = vpop.xlane.xlu0 %137
  %v139 = vsub.f32 %v135, %v138
  %v140 = vmul.f32 %v139, 1.442695
  %v141 = vpow.pop %v140
  %v142 = vsel %vm63, %v141, 0.0
  %143 = vadd.xlane.f32.xlu0 %v142
  %v144 = vpop.xlane.xlu0 %143
  %v145 = vlog2.pop %v144
  %v146 = vmul.f32 %v145, 0.6931472
  %v147 = vsub.f32 %v139, %v146
  %v148 = vmul.f32 %v147, 1.442695
  %v149 = vpow.pop %v148
  %v150 = vsub.f32 %v149, %v77
  %v151 = vmul.f32 %v150, 6.25e-08
  %153 = vset.pattern.permute.xlu0 0
  %154 = vperm.xlu0 %153, %v151
  %v155 = vpop.permute.xlu0 %154
  %v157 = vperm.slane %v34, 0
  %v158 = vmul.f32 %v155, %v157
  %159 = vset.pattern.permute.xlu0 1
  %160 = vperm.xlu0 %159, %v151
  %v161 = vpop.permute.xlu0 %160
  %v163 = vperm.slane %v34, 1
  %v164 = vmul.f32 %v161, %v163
  %v165 = vadd.f32 %v158, %v164
  %v166 = vmul.f32 %v165, %v165
  %v167 = vsel %vm39, %v166, 0.0
  %168 = vadd.xlane.f32.xlu0 %v167
  %v169 = vpop.xlane.xlu0 %168
  %v170 = vrsqrt.pop %v169
  %v171 = vmul.f32 %v170, %v169
  %v172 = vmul.f32 %v171, %v170
  %v173 = vmul.f32 0.5, %v172
  %v174 = vsub.f32 1.5, %v173
  %v175 = vmul.f32 %v170, %v174
  %v176 = vmul.f32 %v169, %v175
  %vm177 = vcmp.eq.f32.partialorder %v169, inf
  %v178 = vsel %vm177, %v169, %v176
  %vm179 = vcmp.eq.f32.partialorder %v169, 0.0
  %v180 = vand.u32 %v169, 2147483648
  %v181 = vsel %vm179, %v180, %v178
  %v182 = vadd.f32 %v181, 1e-08
  %v183 = vrcp.pop %v182
  %v184 = vmul.f32 %v182, %v183
  %v185 = vsub.f32 1.0, %v184
  %v186 = vmul.f32 %v183, %v185
  %v187 = vadd.f32 %v183, %v186
  %vm188 = vweird.f32 %v182
  %vm189 = vweird.f32 %v183
  %vm190 = vmor %vm188, %vm189
  %v191 = vsel %vm190, %v183, %v187
  %v192 = vand.u32 2147483647, %v182
  %vm193 = vcmp.eq.f32.partialorder %v192, 8.507059e+37
  %v194 = vand.u32 %v182, 2147483648
  %v195 = vor.u32 1.1754944e-38, %v194
  %v196 = vsel %vm193, %v195, %v191
  %v197 = vmul.f32 1.0, %v196
  %v198 = vmul.f32 %v165, %v197
  %v199 = vmul.f32 %v25, 100.0
  %v200 = vsub.f32 1.0, %v25
  %v201 = vadd.f32 %v199, %v200
  %v203 = vsel %vm39, %v198, 0
  %205 = vmatpush.msra.mxu0 0.0
  %206 = vmatpush.msra.mxu0 0.0
  %207 = vmatpush.msra.mxu0 0.0
  %208 = vmatpush.msra.mxu0 0.0
  %209 = vmatpush.msra.mxu0 0.0
  %210 = vmatpush.msra.mxu0 0.0
  %211 = vmatpush.msra.mxu0 0.0
  %212 = vmatpush.msra.mxu0 0.0
  %213 = vmatpush.msra.mxu0 %v33
  %214 = vmatpush.msra.mxu0 %v32
  %215 = vmatpush.msra.mxu0 %v31
  %216 = vmatpush.msra.mxu0 %v30
  %217 = vmatpush.msra.mxu0 %v29
  %218 = vmatpush.msra.mxu0 %v28
  %219 = vmatpush.msra.mxu0 %v27
  %220 = vmatpush.msra.mxu0 %v26
  %221 = vmatmul.f32.gmra.mxu0 %v203
  %v222 = vpop.f32.mrf.mxu0
  %v223 = vadd.f32 0.0, %v222
  %224 = vdwg.mxu0
  %226 = vset.pattern.permute.xlu0 0
  %227 = vperm.xlu0 %226, %v201
  %v228 = vpop.permute.xlu0 %227
  %v230 = vmul.f32 %v228, %v223
  %v231 = vadd.f32 %v61, %v230
  %v232 = vsel %vm63, %v231, -inf
  %233 = vmax.xlane.f32.xlu0 %v232
  %v234 = vpop.xlane.xlu0 %233
  %v235 = vsub.f32 %v231, %v234
  %v236 = vmul.f32 %v235, 1.442695
  %v237 = vpow.pop %v236
  %v238 = vsel %vm63, %v237, 0.0
  %239 = vadd.xlane.f32.xlu0 %v238
  %v240 = vpop.xlane.xlu0 %239
  %v241 = vlog2.pop %v240
  %v242 = vmul.f32 %v241, 0.6931472
  %v243 = vsub.f32 %v235, %v242
  %v244 = vsub.f32 %v75, %v243
  %v245 = vmul.f32 %v77, %v244
  %v246 = vsel %vm63, %v245, 0.0
  %247 = vadd.xlane.f32.xlu0 %v246
  %v248 = vpop.xlane.xlu0 %247
  %vm249 = vcmask 7168
  %250 = vst.msk [vmem:[%s6] sm:$0xff] %vm249, %v248
  // Predicated region
  $region26: #{tpu_custom_call.1} parent=0 // pred_check
    _
  $region27: #{tpu_custom_call.1} parent=0 // pred_check_branch
    %252 = sbr.rel (0) target = $region29
  $region28: #{tpu_custom_call.1} parent=0 // pred_region
    _
  $region29: #{tpu_custom_call.1} parent=0 // pred_fallthru
    _
  // Predicated region
  $region30: #{tpu_custom_call.1} parent=0 // pred_check
    _
  $region31: #{tpu_custom_call.1} parent=0 // pred_check_branch
    %254 = sbr.rel (0) target = $region33
  $region32: #{tpu_custom_call.1} parent=0 // pred_region
    _
  $region33: #{tpu_custom_call.1} parent=0 // pred_fallthru
    _

</llo_original>
